<compile_context>
chip_gen: v6e
topology: v6e:2x2x1
jax: 0.10.0
libtpu: 0.0.40
codegen_flags: <defaults>
</compile_context>

<pallas_src>
import jax
import jax.numpy as jnp
from jax.experimental import pallas as pl
from jax.experimental.pallas import tpu as pltpu


def pos_enc_kernel(x_ref, pe_ref, o_ref):
    # x_ref: (1, TS, D), pe_ref: (TS, D), o_ref: (1, TS, D)
    # Pure VPU add; pe broadcasts over the size-1 batch block dim; lane-dense D.
    o_ref[...] = x_ref[...] + pe_ref[...]
    # TODO(synk): training-mode Dropout(p=0.1) not implemented; this matches eval
    # semantics (dropout == identity). For training, add pltpu.prng_seed +
    # pltpu.prng_random_bits masking.


def _pick_seq_tile(S: int, D: int, itemsize: int,
                   vmem_budget_bytes: int = 12 << 20, max_rows: int = 2048):
    """Largest seq tile that divides S, is sublane-aligned for the dtype, and keeps the
    double-buffered VMEM footprint (x + out + pe, 2 buffers each ~= 6 tiles) under
    budget. Returns (ts, need_pe_slice)."""
    if itemsize >= 4:
        align = 8
    elif itemsize == 2:
        align = 16
    else:
        align = 32
    per_row = 6 * D * itemsize
    cap = max(align, min(max_rows, vmem_budget_bytes // per_row))
    cap = (cap // align) * align

    best = None
    t = align
    while t <= min(S, cap):
        if S % t == 0:
            best = t
        t += align
    if best is not None:
        return best, False
    # S is not a multiple of the alignment: use the full sequence as one block.
    # Then the pe block must equal pe's full dims, so the wrapper slices pe to (S, D).
    return S, True


def positional_encoder_learnable(x, pe, *, ts=None, alias_input=False):
    """x: [B, S, D]; pe: [max_seq_len, D] learnable positional embedding."""
    B, S, D = x.shape
    max_seq_len, d_model = pe.shape
    assert d_model == D, "pe feature dim must match x"
    assert S <= max_seq_len, "sequence longer than max_seq_len"

    itemsize = jnp.dtype(x.dtype).itemsize

    need_pe_slice = False
    if ts is None:
        ts, need_pe_slice = _pick_seq_tile(S, D, itemsize)
    else:
        assert S % ts == 0, "seq tile must divide S"

    pe_arg = pe
    if need_pe_slice:
        # Fallback only (S not sublane-aligned): block dims must equal full array dims.
        pe_arg = pe[:S, :]

    # Grid: seq tiles OUTER, batch INNER. pe's block index only depends on the seq
    # index, so it is constant across the innermost (batch) iterations and the
    # pipeliner skips re-fetching it -> pe read ~= S*D bytes total, not B*S*D.
    grid = (S // ts, B)

    cost = pl.CostEstimate(
        flops=B * S * D,                                    # one add per element
        transcendentals=0,
        bytes_accessed=(2 * B * S * D + S * D) * itemsize,  # x read + out write + pe once
    )

    out = pl.pallas_call(
        pos_enc_kernel,
        out_shape=jax.ShapeDtypeStruct((B, S, D), x.dtype),
        grid_spec=pltpu.PrefetchScalarGridSpec(
            num_scalar_prefetch=0,
            grid=grid,
            in_specs=[
                pl.BlockSpec((1, ts, D), lambda s, b: (b, s, 0)),  # x tile
                pl.BlockSpec((ts, D), lambda s, b: (s, 0)),        # pe tile (batch-invariant)
            ],
            out_specs=pl.BlockSpec((1, ts, D), lambda s, b: (b, s, 0)),
        ),
        compiler_params=pltpu.CompilerParams(
            dimension_semantics=("parallel", "parallel"),
        ),
        cost_estimate=cost,
        input_output_aliases=({0: 0} if alias_input else {}),
    )(x, pe_arg)

    return out


def positional_encoder_ref(x, pe):
    # PyTorch: add = pe[:x.size(1), :].squeeze(1)  (squeeze(1) is a no-op for d_model>1)
    return x + pe[: x.shape[1], :]


if __name__ == "__main__":
    B, S, D = 2, 8, 512          # small, module-consistent shapes (d_model=512 default)
    max_seq_len = 64

    key = jax.random.PRNGKey(0)
    kx, kp = jax.random.split(key)

    x = jax.random.normal(kx, (B, S, D), dtype=jnp.float32)
    # nn.Parameter(torch.randn(max_seq_len, d_model) - 0.5)
    pe = jax.random.normal(kp, (max_seq_len, D), dtype=jnp.float32) - 0.5

    out = positional_encoder_learnable(x, pe)
    out = jax.block_until_ready(out)

    ref = positional_encoder_ref(x, pe)
    assert out.shape == (B, S, D)
    assert jnp.allclose(out, ref, atol=1e-6, rtol=1e-6), "mismatch vs reference"

    print("KERNEL_OK")
</pallas_src>

<mosaic_0001>
module attributes {stable_mosaic.version = 11 : i64} {
  func.func @pos_enc_kernel(%arg0: i32, %arg1: i32, %arg2: memref<1x8x512xf32, #tpu.memory_space<vmem>>, %arg3: memref<8x512xf32, #tpu.memory_space<vmem>>, %arg4: memref<1x8x512xf32, #tpu.memory_space<vmem>>) attributes {dimension_semantics = [#tpu.dimension_semantics<parallel>, #tpu.dimension_semantics<parallel>], iteration_bounds = array<i64: 1, 2>, scalar_prefetch = 0 : i64, scratch_operands = 0 : i64, tpu.core_type = #tpu.core_type<tc>, window_params = [{transform_indices = @transform_0, window_bounds = array<i64: 1, 8, 512>}, {transform_indices = @transform_1, window_bounds = array<i64: 8, 512>}, {transform_indices = @transform_2, window_bounds = array<i64: 1, 8, 512>}]} {
    %c0 = arith.constant 0 : index
    %c0_0 = arith.constant 0 : index
    %c0_1 = arith.constant 0 : index
    %0 = vector.load %arg2[%c0, %c0_0, %c0_1] : memref<1x8x512xf32, #tpu.memory_space<vmem>>, vector<1x8x512xf32>
    %c0_2 = arith.constant 0 : index
    %c0_3 = arith.constant 0 : index
    %1 = vector.load %arg3[%c0_2, %c0_3] : memref<8x512xf32, #tpu.memory_space<vmem>>, vector<8x512xf32>
    %2 = vector.shape_cast %1 : vector<8x512xf32> to vector<1x8x512xf32>
    %3 = arith.addf %0, %2 : vector<1x8x512xf32>
    %c0_4 = arith.constant 0 : index
    %c0_5 = arith.constant 0 : index
    %c0_6 = arith.constant 0 : index
    %4 = vector.load %arg4[%c0_4, %c0_5, %c0_6] : memref<1x8x512xf32, #tpu.memory_space<vmem>>, vector<1x8x512xf32>
    tpu.vector_store %arg4[%c0_4, %c0_5, %c0_6], %3 {strides = array<i32>} : memref<1x8x512xf32, #tpu.memory_space<vmem>>, vector<1x8x512xf32>,
    return
  }
  func.func @transform_0(%arg0: i32, %arg1: i32) -> (i32, i32, i32) {
    %c0_i32 = arith.constant 0 : i32
    %c0_i32_0 = arith.constant 0 : i32
    return %arg1, %arg0, %c0_i32 : i32, i32, i32
  }
  func.func @transform_1(%arg0: i32, %arg1: i32) -> (i32, i32) {
    %c0_i32 = arith.constant 0 : i32
    %c0_i32_0 = arith.constant 0 : i32
    return %arg0, %c0_i32 : i32, i32
  }
  func.func @transform_2(%arg0: i32, %arg1: i32) -> (i32, i32, i32) {
    %c0_i32 = arith.constant 0 : i32
    %c0_i32_0 = arith.constant 0 : i32
    return %arg1, %arg0, %c0_i32 : i32, i32, i32
  }
}

</mosaic_0001>

<llo_original>
// kernel: tpu_custom_call.1
$region0: #{tpu_custom_call.1}
  #allocation0 [shape = 'u32[]', space=smem, size = 0x4, offset = 0x4, fixed_abs, tag = 'smem constant byte address 0x4 - core index']
  #allocation1 [shape = 'u32[144,128]{1,0:T(1,128)}', space=vmem, size = 0x12000, scoped, tag = 'internal scratch']
  %s0 = inlined_call_operand.hbm [shape: f32[2,8,512], index: 0, kind: input, shape index: {}]
  %s1 = inlined_call_operand.hbm [shape: f32[64,512], index: 1, kind: input, shape index: {}]
  %s2 = inlined_call_operand.hbm [shape: f32[2,8,512], index: 2, kind: output, shape index: {}]
  %s3 = sld [smem:[#allocation0]]
  $region49: #{tpu_custom_call.1} parent=0
    _
  %s5 = ssub.s32 1, %s3
  %s6 = scalar_select 0, %s5, %s3
  $region1: #{tpu_custom_call.1} parent=0
    #allocation2 [shape = 'u8[32768]{0}', space=vmem, size = 0x8000, scoped, tag = 'input window, operand 0']
    #allocation3 [shape = 's32[2]{0}', space=sflag, size = 0x8, scoped, tag = 'scoped memory for tpu_custom_call.1']
    #allocation4 [shape = 's32[2]{0}', space=sflag, size = 0x8, scoped, tag = 'scoped memory for tpu_custom_call.1']
    #allocation5 [shape = 'u8[16384]{0}', space=vmem, size = 0x4000, scoped, tag = 'input window, operand 1, single buffered']
    #allocation6 [shape = 's32[1]{0}', space=sflag, size = 0x4, scoped, tag = 'scoped memory for tpu_custom_call.1']
    #allocation7 [shape = 'u8[32768]{0}', space=vmem, size = 0x8000, scoped, tag = 'output window, operand 0']
    %7 = vsyncpa [#allocation3], 0
    %s8 = scalar_lea.sflag [#allocation3], 1
    %9 = vsyncpa %s8, 0
    %10 = vsyncpa [#allocation6], 0
    %11 = vsyncpa [#allocation4], 0
    %s12 = scalar_lea.sflag [#allocation4], 1
    %13 = vsyncpa %s12, 0
    loop: start=0, step=1, limit=4
    $region2: #{tpu_custom_call.1} parent=1 // loop_pre_header
      _
    $region3: #{tpu_custom_call.1} parent=1 // loop_header
      %s15 = sphi 0, %s19
      %p16 = scmp.ge.s32.totalorder %s15, 4
      %s22 = sphi 0, %s34
      %s23 = sphi 0, %s30
      %s24 = sphi 0, %s22
      %s25 = sphi 0, %s23
      %s26 = sphi 0, %s24
      %s27 = sphi 0, %s25
      %s39 = sphi 0, %s41
      %s42 = sphi 0, %s39
      %s43 = sphi 0, %s42
      %s59 = sphi 0, %s43
      %s65 = sphi 0, %s67
      %s68 = sphi 0, %s65
      %s69 = sphi 0, %s68
      %s85 = sphi 0, %s69
      %s93 = sphi 0, %s95
      %s96 = sphi 0, %s93
      %s97 = sphi 0, %s96
      %s113 = sphi 0, %s97
    $region4: #{tpu_custom_call.1} parent=1 // loop_header_branch
      %18 = sbr.rel (%p16) target = $region8
    $region5: #{tpu_custom_call.1} parent=1 // loop_body
      %s20 = ssub.s32 %s15, 1
      %s21 = ssub.s32 %s15, 2
      %s28 = sadd.s32 1, %s23
      %p29 = scmp.ge.s32.totalorder %s28, 2
      %s30 = scalar_select %p29, 0, %s28
      %s31 = sadd.s32 1, %s22
      %s32 = scalar_select %p29, %s31, %s22
      %p33 = scmp.ge.s32.totalorder %s32, 1
      %s34 = scalar_select %p33, 0, %s32
      %s35 = ssub.s32 %s23, %s30
      %s36 = ssub.s32 %s22, %s34
      %s37 = sor.u32 %s35, %s36
      %p38 = scmp.eq.s32.totalorder %s37, 0
      %s40 = sadd.s32 %s39, 1
      %s41 = scalar_select %p38, %s39, %s40
      %p44 = pneg %p38
      %p45 = scmp.eq.s32.totalorder %s15, 1
      %p46 = por %p44, %p45
      %p47 = scmp.ne.s32.totalorder %s39, %s42
      %p48 = scmp.eq.s32.totalorder %s15, 0
      %p49 = por %p47, %p48
      %p50 = scmp.ne.s32.totalorder %s39, %s42
      %p51 = scmp.eq.s32.totalorder %s20, 1
      %p52 = por %p50, %p51
      %p53 = scmp.ne.s32.totalorder %s42, %s43
      %p54 = scmp.eq.s32.totalorder %s20, 0
      %p55 = por %p53, %p54
      %p56 = scmp.ne.s32.totalorder %s42, %s43
      %p57 = scmp.eq.s32.totalorder %s21, 1
      %p58 = por %p56, %p57
      %p60 = scmp.ne.s32.totalorder %s43, %s59
      %p61 = scmp.eq.s32.totalorder %s21, 0
      %p62 = por %p60, %p61
      %s63 = ssub.s32 %s22, %s34
      %p64 = scmp.eq.s32.totalorder %s63, 0
      %s66 = sadd.s32 %s65, 1
      %s67 = scalar_select %p64, %s65, %s66
      %p70 = pneg %p64
      %p71 = scmp.eq.s32.totalorder %s15, 1
      %p72 = por %p70, %p71
      %p73 = scmp.ne.s32.totalorder %s65, %s68
      %p74 = scmp.eq.s32.totalorder %s15, 0
      %p75 = por %p73, %p74
      %p76 = scmp.ne.s32.totalorder %s65, %s68
      %p77 = scmp.eq.s32.totalorder %s20, 1
      %p78 = por %p76, %p77
      %p79 = scmp.ne.s32.totalorder %s68, %s69
      %p80 = scmp.eq.s32.totalorder %s20, 0
      %p81 = por %p79, %p80
      %p82 = scmp.ne.s32.totalorder %s68, %s69
      %p83 = scmp.eq.s32.totalorder %s21, 1
      %p84 = por %p82, %p83
      %p86 = scmp.ne.s32.totalorder %s69, %s85
      %p87 = scmp.eq.s32.totalorder %s21, 0
      %p88 = por %p86, %p87
      %s89 = ssub.s32 %s23, %s30
      %s90 = ssub.s32 %s22, %s34
      %s91 = sor.u32 %s89, %s90
      %p92 = scmp.eq.s32.totalorder %s91, 0
      %s94 = sadd.s32 %s93, 1
      %s95 = scalar_select %p92, %s93, %s94
      %p98 = pneg %p92
      %p99 = scmp.eq.s32.totalorder %s15, 1
      %p100 = por %p98, %p99
      %p101 = scmp.ne.s32.totalorder %s93, %s96
      %p102 = scmp.eq.s32.totalorder %s15, 0
      %p103 = por %p101, %p102
      %p104 = scmp.ne.s32.totalorder %s93, %s96
      %p105 = scmp.eq.s32.totalorder %s20, 1
      %p106 = por %p104, %p105
      %p107 = scmp.ne.s32.totalorder %s96, %s97
      %p108 = scmp.eq.s32.totalorder %s20, 0
      %p109 = por %p107, %p108
      %p110 = scmp.ne.s32.totalorder %s96, %s97
      %p111 = scmp.eq.s32.totalorder %s21, 1
      %p112 = por %p110, %p111
      %p114 = scmp.ne.s32.totalorder %s97, %s113
      %p115 = scmp.eq.s32.totalorder %s21, 0
      %p116 = por %p114, %p115
      %p117 = scmp.le.s32.totalorder 1, %s15
      %p118 = scmp.lt.s32.totalorder %s15, 3
      %p119 = pnand %p117, %p118
      %p120 = pneg %p119
      // Predicated region
      $region9: #{tpu_custom_call.1} parent=5 // pred_check
        _
      $region10: #{tpu_custom_call.1} parent=5 // pred_check_branch
        %122 = sbr.rel (%p119) target = $region12
      $region11: #{tpu_custom_call.1} parent=5 // pred_region
        %s123 = ssub.s32 %s15, 1
        // Predicated region
        $region13: #{tpu_custom_call.1} parent=11 // pred_check
          %p124 = pneg %p81
        $region14: #{tpu_custom_call.1} parent=11 // pred_check_branch
          %126 = sbr.rel (%p124) target = $region16
        $region15: #{tpu_custom_call.1} parent=11 // pred_region
          %s128 = ssub.s32 512, 512
          %129 = vsyncadd [#allocation6], %s128
          %s130 = smul.addr %s24, 4
          %s131 = smul.addr %s130, 128
          %s132 = scalar_lea.hbm %s1, %s131
          %s134 = sshll.u32 [#allocation5], 4
          %s135 = int_to_ptr.vmem [resolvable:$true] %s134
          %137 = dma.hbm_to_vmem [thread:$0]  %s132, 512, %s135, [#allocation6]
        $region16: #{tpu_custom_call.1} parent=11 // pred_fallthru
          _
      $region12: #{tpu_custom_call.1} parent=5 // pred_fallthru
        _
      %p138 = scmp.lt.s32.totalorder %s15, 2
      // Predicated region
      $region17: #{tpu_custom_call.1} parent=5 // pred_check
        %p139 = pneg %p138
      $region18: #{tpu_custom_call.1} parent=5 // pred_check_branch
        %141 = sbr.rel (%p139) target = $region20
      $region19: #{tpu_custom_call.1} parent=5 // pred_region
        // Predicated region
        $region21: #{tpu_custom_call.1} parent=19 // pred_check
          %p142 = pneg %p49
        $region22: #{tpu_custom_call.1} parent=19 // pred_check_branch
          %144 = sbr.rel (%p142) target = $region24
        $region23: #{tpu_custom_call.1} parent=19 // pred_region
          %s145 = sand.u32 %s39, 1
          %s146 = scalar_lea.sflag [#allocation3], %s145
          %s147 = sand.u32 %s39, 1
          %s148 = smul.addr %s147, 32
          %s149 = scalar_lea.vmem [#allocation2], %s148
          %s151 = ssub.s32 512, 512
          %152 = vsyncadd %s146, %s151
          %s153 = smul.addr %s22, 4
          %s154 = smul.addr %s23, 4
          %s155 = sadd.s32 %s153, %s154
          %s156 = smul.addr %s155, 128
          %s157 = scalar_lea.hbm %s0, %s156
          %s159 = sshll.u32 %s149, 4
          %s160 = int_to_ptr.vmem [resolvable:$true] %s159
          %162 = dma.hbm_to_vmem [thread:$0]  %s157, 512, %s160, %s146
        $region24: #{tpu_custom_call.1} parent=19 // pred_fallthru
          _
      $region20: #{tpu_custom_call.1} parent=5 // pred_fallthru
        _
      %p163 = scmp.le.s32.totalorder 1, %s15
      %p164 = scmp.lt.s32.totalorder %s15, 3
      %p165 = pnand %p163, %p164
      %p166 = pneg %p165
      // Predicated region
      $region25: #{tpu_custom_call.1} parent=5 // pred_check
        _
      $region26: #{tpu_custom_call.1} parent=5 // pred_check_branch
        %168 = sbr.rel (%p165) target = $region28
      $region27: #{tpu_custom_call.1} parent=5 // pred_region
        %s169 = ssub.s32 %s15, 1
        %s170 = sand.u32 %s42, 1
        %s171 = scalar_lea.sflag [#allocation3], %s170
        %s172 = sand.u32 %s42, 1
        %s173 = smul.addr %s172, 32
        %s174 = scalar_lea.vmem [#allocation2], %s173
        // Predicated region
        $region29: #{tpu_custom_call.1} parent=27 // pred_check
          %p175 = pneg %p55
        $region30: #{tpu_custom_call.1} parent=27 // pred_check_branch
          %177 = sbr.rel (%p175) target = $region32
        $region31: #{tpu_custom_call.1} parent=27 // pred_region
          %178 = dma.done %s171, 512
        $region32: #{tpu_custom_call.1} parent=27 // pred_fallthru
          _
        // Predicated region
        $region33: #{tpu_custom_call.1} parent=27 // pred_check
          %p179 = pneg %p81
        $region34: #{tpu_custom_call.1} parent=27 // pred_check_branch
          %181 = sbr.rel (%p179) target = $region36
        $region35: #{tpu_custom_call.1} parent=27 // pred_region
          %182 = dma.done [#allocation6], 512
        $region36: #{tpu_custom_call.1} parent=27 // pred_fallthru
          _
        %s183 = sand.u32 %s42, 1
        %s184 = scalar_lea.sflag [#allocation3], %s183
        %s185 = sand.u32 %s42, 1
        %s186 = smul.addr %s185, 32
        %s187 = scalar_lea.vmem [#allocation2], %s186
        %p188 = pneg %p55
        %p189 = pneg %p52
        %p190 = pneg %p81
        %p191 = pneg %p78
        %p192 = pneg %p109
        %p193 = pneg %p106
        %s194 = sand.u32 %s96, 1
        %s195 = scalar_lea.sflag [#allocation4], %s194
        %s196 = sand.u32 %s96, 1
        %s197 = smul.addr %s196, 32
        %s198 = scalar_lea.vmem [#allocation7], %s197
        %v199 = vld [vmem:[%s174] sm:$0xff]
        %v200 = vld [vmem:[%s174 + $0x8] sm:$0xff]
        %v201 = vld [vmem:[%s174 + $0x10] sm:$0xff]
        %v202 = vld [vmem:[%s174 + $0x18] sm:$0xff]
        %v203 = vld [vmem:[#allocation5] sm:$0xff]
        %v204 = vld [vmem:[#allocation5 + $0x8] sm:$0xff]
        %v205 = vld [vmem:[#allocation5 + $0x10] sm:$0xff]
        %v206 = vld [vmem:[#allocation5 + $0x18] sm:$0xff]
        %v207 = vadd.f32 %v199, %v203
        %v208 = vadd.f32 %v200, %v204
        %v209 = vadd.f32 %v201, %v205
        %v210 = vadd.f32 %v202, %v206
        %211 = vst [vmem:[%s198] sm:$0xff] %v207
        %212 = vst [vmem:[%s198 + $0x8] sm:$0xff] %v208
        %213 = vst [vmem:[%s198 + $0x10] sm:$0xff] %v209
        %214 = vst [vmem:[%s198 + $0x18] sm:$0xff] %v210
        %s215 = sand.u32 %s96, 1
        %s216 = scalar_lea.sflag [#allocation4], %s215
        %s217 = sand.u32 %s96, 1
        %s218 = smul.addr %s217, 32
        %s219 = scalar_lea.vmem [#allocation7], %s218
        // Predicated region
        $region37: #{tpu_custom_call.1} parent=27 // pred_check
          %p220 = pneg %p106
        $region38: #{tpu_custom_call.1} parent=27 // pred_check_branch
          %222 = sbr.rel (%p220) target = $region40
        $region39: #{tpu_custom_call.1} parent=27 // pred_region
          %s224 = ssub.s32 512, 512
          %225 = vsyncadd %s216, %s224
          %s226 = smul.addr %s24, 4
          %s227 = smul.addr %s25, 4
          %s228 = sadd.s32 %s226, %s227
          %s229 = smul.addr %s228, 128
          %s230 = scalar_lea.hbm %s2, %s229
          %s232 = sshll.u32 %s219, 4
          %s233 = int_to_ptr.vmem [resolvable:$true] %s232
          %235 = dma.vmem_to_hbm [thread:$0]  %s233, 512, %s230, %s216
        $region40: #{tpu_custom_call.1} parent=27 // pred_fallthru
          _
      $region28: #{tpu_custom_call.1} parent=5 // pred_fallthru
        _
      %p236 = scmp.le.s32.totalorder 2, %s15
      // Predicated region
      $region41: #{tpu_custom_call.1} parent=5 // pred_check
        %p237 = pneg %p236
      $region42: #{tpu_custom_call.1} parent=5 // pred_check_branch
        %239 = sbr.rel (%p237) target = $region44
      $region43: #{tpu_custom_call.1} parent=5 // pred_region
        %s240 = ssub.s32 %s15, 2
        // Predicated region
        $region45: #{tpu_custom_call.1} parent=43 // pred_check
          %p241 = pneg %p112
        $region46: #{tpu_custom_call.1} parent=43 // pred_check_branch
          %243 = sbr.rel (%p241) target = $region48
        $region47: #{tpu_custom_call.1} parent=43 // pred_region
          %s244 = sand.u32 %s97, 1
          %s245 = scalar_lea.sflag [#allocation4], %s244
          %s246 = sand.u32 %s97, 1
          %s247 = smul.addr %s246, 32
          %s248 = scalar_lea.vmem [#allocation7], %s247
          %249 = dma.done %s245, 512
        $region48: #{tpu_custom_call.1} parent=43 // pred_fallthru
          _
      $region44: #{tpu_custom_call.1} parent=5 // pred_fallthru
        _
    $region6: #{tpu_custom_call.1} parent=1 // loop_footer
      %s19 = sadd.s32 1, %s15
    $region7: #{tpu_custom_call.1} parent=1 // loop_footer_branch
      %14 = sbr.rel target = $region3
    $region8: #{tpu_custom_call.1} parent=1 // loop_exit
      _
    %250 = vsyncpa [#allocation3], 1
    %s251 = scalar_lea.sflag [#allocation3], 1
    %252 = vsyncpa %s251, 1
    %253 = vsyncpa [#allocation6], 1
    %254 = vsyncpa [#allocation4], 1
    %s255 = scalar_lea.sflag [#allocation4], 1
    %256 = vsyncpa %s255, 1

</llo_original>
